<compile_context>
chip_gen: v6e
topology: v6e:2x2x1
jax: 0.10.0
libtpu: 0.0.40
codegen_flags: <defaults>
</compile_context>

<pallas_src>
import functools

import jax
import jax.numpy as jnp
from jax import lax
from jax.experimental import pallas as pl
from jax.experimental.pallas import tpu as pltpu

LANE = 128  # lane width of the fused QKV weight / output slab


def tigre_kernel(x_ref, wseq_ref, bseq_ref, wqkv_ref, wps_ref, wpr_ref, bp_ref,
                 out_ref, *, d_attn):
    hidden = wseq_ref.shape[1]

    # ---- SequentialEmbedding: per-stock MLP over the flattened window ----
    b_seq = bseq_ref[...]                                               # (1, H), loaded once
    seq = jnp.tanh(
        jnp.dot(x_ref[...], wseq_ref[...], preferred_element_type=jnp.float32) + b_seq
    )                                                                   # (N, H)

    # ---- RelationalEmbedding: fused lane-dense QKV projection + attention over stocks ----
    qkv = jnp.dot(seq, wqkv_ref[...], preferred_element_type=jnp.float32)  # (N, 128)
    q = qkv[:, 0:d_attn]                                                # (N, D)
    k = qkv[:, d_attn:2 * d_attn]                                       # (N, D)
    v = qkv[:, 2 * d_attn:2 * d_attn + hidden]                          # (N, H)

    # q @ k^T without materializing a transpose: contract the last dims directly.
    scores = lax.dot_general(q, k, (((1,), (1,)), ((), ())),
                             preferred_element_type=jnp.float32)        # (N, N)
    scores = scores * (1.0 / jnp.sqrt(float(d_attn)))
    scores = scores - jnp.max(scores, axis=-1, keepdims=True)
    e = jnp.exp(scores)
    attn = e * pl.reciprocal(jnp.sum(e, axis=-1, keepdims=True), approx=True)  # (N, N)
    rel = jnp.tanh(jnp.dot(attn, v, preferred_element_type=jnp.float32))       # (N, H)

    # ---- Prediction: concat(seq, rel) @ W_pred + b as VPU multiply + lane-reduce ----
    bias = bp_ref[0]                                                    # SMEM scalar
    pred = (jnp.sum(seq * wps_ref[...] + rel * wpr_ref[...], axis=-1, keepdims=True)
            + bias)                                                     # (N, 1)

    # Lane-dense store: broadcast the prediction column across all 128 lanes.
    out_ref[...] = jnp.broadcast_to(pred, out_ref.shape)


def tigre_forward(x, params):
    """x: (W, N, F) float32 -> predictions (N,) float32."""
    W, N, F = x.shape
    # Glue: flatten window/time into the feature axis, per stock.
    x_flat = jnp.transpose(x, (1, 0, 2)).reshape(N, W * F)              # (N, W*F)

    (w_seq, b_seq, w_qkv, wp_seq, wp_rel, b_pred) = params
    d_attn = (w_qkv.shape[1] and None)  # placeholder to avoid confusion; real value below
    hidden = w_seq.shape[1]
    d_attn = hidden  # this config uses D_ATTN == HIDDEN (fused layout assumes it)

    vmem_inputs = (x_flat, w_seq, b_seq, w_qkv, wp_seq, wp_rel)
    full_spec = lambda a: pl.BlockSpec(a.shape, lambda: tuple(0 for _ in a.shape))
    in_specs = [full_spec(a) for a in vmem_inputs]
    # b_pred: SMEM scalar — read via the scalar path, no padded VMEM tile.
    in_specs.append(pl.BlockSpec(memory_space=pltpu.MemorySpace.SMEM))

    out = pl.pallas_call(
        functools.partial(tigre_kernel, d_attn=d_attn),
        out_shape=jax.ShapeDtypeStruct((N, LANE), jnp.float32),
        grid=(),
        in_specs=in_specs,
        out_specs=pl.BlockSpec((N, LANE), lambda: (0, 0)),
    )(*vmem_inputs, b_pred)
    return out[:, 0]                                                    # (N,)


def init_params(key, window, n_stocks, n_feat, hidden, d_attn):
    assert d_attn == hidden, "fused QKV layout in this script assumes D_ATTN == HIDDEN"
    assert 2 * d_attn + hidden <= LANE
    keys = jax.random.split(key, 8)
    s = 0.1
    w_seq = s * jax.random.normal(keys[0], (window * n_feat, hidden), jnp.float32)
    b_seq = s * jax.random.normal(keys[1], (1, hidden), jnp.float32)
    w_q = s * jax.random.normal(keys[2], (hidden, d_attn), jnp.float32)
    w_k = s * jax.random.normal(keys[3], (hidden, d_attn), jnp.float32)
    w_v = s * jax.random.normal(keys[4], (hidden, hidden), jnp.float32)
    # Fuse Q/K/V into one lane-dense (H, 128) weight, zero-padded past 2*D+H.
    w_qkv = jnp.zeros((hidden, LANE), jnp.float32)
    w_qkv = w_qkv.at[:, 0:d_attn].set(w_q)
    w_qkv = w_qkv.at[:, d_attn:2 * d_attn].set(w_k)
    w_qkv = w_qkv.at[:, 2 * d_attn:2 * d_attn + hidden].set(w_v)
    # Prediction weights as (1, H) rows (VPU multiply + lane-reduce in-kernel).
    wp_seq = s * jax.random.normal(keys[5], (1, hidden), jnp.float32)
    wp_rel = s * jax.random.normal(keys[6], (1, hidden), jnp.float32)
    b_pred = s * jax.random.normal(keys[7], (1,), jnp.float32)          # SMEM scalar
    return (w_seq, b_seq, w_qkv, wp_seq, wp_rel, b_pred)


def reference_forward(x, params):
    """Pure-JAX reference of the same math (for sanity check)."""
    W, N, F = x.shape
    x_flat = jnp.transpose(x, (1, 0, 2)).reshape(N, W * F)
    (w_seq, b_seq, w_qkv, wp_seq, wp_rel, b_pred) = params
    hidden = w_seq.shape[1]
    d_attn = hidden
    w_q = w_qkv[:, 0:d_attn]
    w_k = w_qkv[:, d_attn:2 * d_attn]
    w_v = w_qkv[:, 2 * d_attn:2 * d_attn + hidden]
    seq = jnp.tanh(x_flat @ w_seq + b_seq)
    q, k, v = seq @ w_q, seq @ w_k, seq @ w_v
    attn = jax.nn.softmax(q @ k.T / jnp.sqrt(float(d_attn)), axis=-1)
    rel = jnp.tanh(attn @ v)
    return jnp.sum(seq * wp_seq + rel * wp_rel, axis=-1) + b_pred[0]    # (N,)


if __name__ == "__main__":
    # Small shapes implied by the TIGRE forward: (window, stocks, features)
    WINDOW, N_STOCKS, N_FEAT = 8, 16, 4
    HIDDEN, D_ATTN = 32, 32

    key = jax.random.PRNGKey(0)
    k_x, k_p = jax.random.split(key)
    x = jax.random.normal(k_x, (WINDOW, N_STOCKS, N_FEAT), jnp.float32)
    params = init_params(k_p, WINDOW, N_STOCKS, N_FEAT, HIDDEN, D_ATTN)

    preds = tigre_forward(x, params)
    preds = jax.block_until_ready(preds)

    ref = reference_forward(x, params)
    assert preds.shape == (N_STOCKS,)
    # approx=True reciprocal in the softmax denominator is ~2^-12 relative accurate.
    assert jnp.allclose(preds, ref, atol=2e-3, rtol=2e-3), "mismatch vs JAX reference"

    print("KERNEL_OK")
</pallas_src>

<mosaic_0001>
module attributes {stable_mosaic.version = 11 : i64} {
  func.func @tigre_kernel(%arg0: memref<16x32xf32, #tpu.memory_space<vmem>>, %arg1: memref<32x32xf32, #tpu.memory_space<vmem>>, %arg2: memref<1x32xf32, #tpu.memory_space<vmem>>, %arg3: memref<32x128xf32, #tpu.memory_space<vmem>>, %arg4: memref<1x32xf32, #tpu.memory_space<vmem>>, %arg5: memref<1x32xf32, #tpu.memory_space<vmem>>, %arg6: memref<1xf32, #tpu.memory_space<smem>>, %arg7: memref<16x128xf32, #tpu.memory_space<vmem>>) attributes {dimension_semantics = [], scalar_prefetch = 0 : i64, scratch_operands = 0 : i64, tpu.core_type = #tpu.core_type<tc>} {
    %c0 = arith.constant 0 : index
    %c0_0 = arith.constant 0 : index
    %0 = vector.load %arg2[%c0, %c0_0] : memref<1x32xf32, #tpu.memory_space<vmem>>, vector<1x32xf32>
    %c0_1 = arith.constant 0 : index
    %c0_2 = arith.constant 0 : index
    %1 = vector.load %arg0[%c0_1, %c0_2] : memref<16x32xf32, #tpu.memory_space<vmem>>, vector<16x32xf32>
    %c0_3 = arith.constant 0 : index
    %c0_4 = arith.constant 0 : index
    %2 = vector.load %arg1[%c0_3, %c0_4] : memref<32x32xf32, #tpu.memory_space<vmem>>, vector<32x32xf32>
    %cst = arith.constant dense<0.000000e+00> : vector<16x32xf32>
    %3 = tpu.matmul %1, %2, %cst {dimension_numbers = #tpu.dot_dimension_numbers<[1], [0], [0], [1], [0, 0, 1, 1], [], []>} : vector<16x32xf32>, vector<32x32xf32>, vector<16x32xf32> -> vector<16x32xf32>
    %4 = vector.broadcast %0 : vector<1x32xf32> to vector<16x32xf32>
    %5 = arith.addf %3, %4 : vector<16x32xf32>
    %6 = math.tanh %5 : vector<16x32xf32>
    %c0_5 = arith.constant 0 : index
    %c0_6 = arith.constant 0 : index
    %7 = vector.load %arg3[%c0_5, %c0_6] : memref<32x128xf32, #tpu.memory_space<vmem>>, vector<32x128xf32>
    %cst_7 = arith.constant dense<0.000000e+00> : vector<16x128xf32>
    %8 = tpu.matmul %6, %7, %cst_7 {dimension_numbers = #tpu.dot_dimension_numbers<[1], [0], [0], [1], [0, 0, 1, 1], [], []>} : vector<16x32xf32>, vector<32x128xf32>, vector<16x128xf32> -> vector<16x128xf32>
    %9 = vector.extract_strided_slice %8 {offsets = [0, 0], sizes = [16, 32], strides = [1, 1]} : vector<16x128xf32> to vector<16x32xf32>
    %10 = vector.extract_strided_slice %8 {offsets = [0, 32], sizes = [16, 32], strides = [1, 1]} : vector<16x128xf32> to vector<16x32xf32>
    %11 = vector.extract_strided_slice %8 {offsets = [0, 64], sizes = [16, 32], strides = [1, 1]} : vector<16x128xf32> to vector<16x32xf32>
    %cst_8 = arith.constant dense<0.000000e+00> : vector<16x16xf32>
    %12 = tpu.matmul %9, %10, %cst_8 {dimension_numbers = #tpu.dot_dimension_numbers<[1], [1], [0], [0], [0, 0, 1, 0], [], []>} : vector<16x32xf32>, vector<16x32xf32>, vector<16x16xf32> -> vector<16x16xf32>
    %cst_9 = arith.constant 3.200000e+01 : f32
    %13 = math.sqrt %cst_9 : f32
    %cst_10 = arith.constant 1.000000e+00 : f32
    %14 = arith.divf %cst_10, %13 : f32
    %15 = vector.broadcast %14 : f32 to vector<16x16xf32>
    %16 = arith.mulf %12, %15 : vector<16x16xf32>
    %cst_11 = arith.constant dense<0xFF800000> : vector<16xf32>
    %17 = vector.multi_reduction <maximumf>, %16, %cst_11 [1] : vector<16x16xf32> to vector<16xf32>
    %18 = vector.shape_cast %17 : vector<16xf32> to vector<16x1xf32>
    %19 = vector.broadcast %18 : vector<16x1xf32> to vector<16x16xf32>
    %20 = arith.subf %16, %19 : vector<16x16xf32>
    %21 = math.exp %20 : vector<16x16xf32>
    %cst_12 = arith.constant dense<0.000000e+00> : vector<16xf32>
    %22 = vector.multi_reduction <add>, %21, %cst_12 [1] : vector<16x16xf32> to vector<16xf32>
    %23 = vector.shape_cast %22 : vector<16xf32> to vector<16x1xf32>
    %24 = tpu.reciprocal %23 {approx = true} : vector<16x1xf32> -> vector<16x1xf32>
    %25 = vector.broadcast %24 : vector<16x1xf32> to vector<16x16xf32>
    %26 = arith.mulf %21, %25 : vector<16x16xf32>
    %cst_13 = arith.constant dense<0.000000e+00> : vector<16x32xf32>
    %27 = tpu.matmul %26, %11, %cst_13 {dimension_numbers = #tpu.dot_dimension_numbers<[1], [0], [0], [1], [0, 0, 1, 1], [], []>} : vector<16x16xf32>, vector<16x32xf32>, vector<16x32xf32> -> vector<16x32xf32>
    %28 = math.tanh %27 : vector<16x32xf32>
    %c0_14 = arith.constant 0 : index
    %29 = memref.load %arg6[%c0_14] : memref<1xf32, #tpu.memory_space<smem>>
    %c0_15 = arith.constant 0 : index
    %c0_16 = arith.constant 0 : index
    %30 = vector.load %arg4[%c0_15, %c0_16] : memref<1x32xf32, #tpu.memory_space<vmem>>, vector<1x32xf32>
    %31 = vector.broadcast %30 : vector<1x32xf32> to vector<16x32xf32>
    %32 = arith.mulf %6, %31 : vector<16x32xf32>
    %c0_17 = arith.constant 0 : index
    %c0_18 = arith.constant 0 : index
    %33 = vector.load %arg5[%c0_17, %c0_18] : memref<1x32xf32, #tpu.memory_space<vmem>>, vector<1x32xf32>
    %34 = vector.broadcast %33 : vector<1x32xf32> to vector<16x32xf32>
    %35 = arith.mulf %28, %34 : vector<16x32xf32>
    %36 = arith.addf %32, %35 : vector<16x32xf32>
    %cst_19 = arith.constant dense<0.000000e+00> : vector<16xf32>
    %37 = vector.multi_reduction <add>, %36, %cst_19 [1] : vector<16x32xf32> to vector<16xf32>
    %38 = vector.shape_cast %37 : vector<16xf32> to vector<16x1xf32>
    %39 = vector.broadcast %29 : f32 to vector<16x1xf32>
    %40 = arith.addf %38, %39 : vector<16x1xf32>
    %41 = vector.shape_cast %40 : vector<16x1xf32> to vector<16x1xf32>
    %42 = vector.broadcast %41 : vector<16x1xf32> to vector<16x128xf32>
    %c0_20 = arith.constant 0 : index
    %c0_21 = arith.constant 0 : index
    %43 = vector.load %arg7[%c0_20, %c0_21] : memref<16x128xf32, #tpu.memory_space<vmem>>, vector<16x128xf32>
    tpu.vector_store %arg7[%c0_20, %c0_21], %42 {strides = array<i32>} : memref<16x128xf32, #tpu.memory_space<vmem>>, vector<16x128xf32>,
    return
  }
}

</mosaic_0001>

<llo_original>
// kernel: tpu_custom_call.1
$region0: #{tpu_custom_call.1}
  #allocation0 [shape = 'u32[]', space=smem, size = 0x4, offset = 0x4, fixed_abs, tag = 'smem constant byte address 0x4 - core index']
  #allocation1 [shape = 'u32[144,128]{1,0:T(1,128)}', space=vmem, size = 0x12000, scoped, tag = 'internal scratch']
  #allocation2 [shape = 'f32[1]{0:T(128)S(6)}', space=smem, size = 0x200, scoped, tag = 'scoped memory for tpu_custom_call.1']
  %s0 = inlined_call_operand.hbm [shape: f32[16,32], index: 0, kind: input, shape index: {}]
  %s1 = inlined_call_operand.hbm [shape: f32[32,32], index: 1, kind: input, shape index: {}]
  %s2 = inlined_call_operand.vmem [shape: f32[1,32], index: 2, kind: input, shape index: {}]
  %s3 = inlined_call_operand.hbm [shape: f32[32,128], index: 3, kind: input, shape index: {}]
  %s4 = inlined_call_operand.vmem [shape: f32[1,32], index: 4, kind: input, shape index: {}]
  %s5 = inlined_call_operand.vmem [shape: f32[1,32], index: 5, kind: input, shape index: {}]
  %s6 = inlined_call_operand.<no memory space> [shape: f32[1], index: 6, kind: input, shape index: {}]
  %s7 = inlined_call_operand.hbm [shape: f32[16,128], index: 7, kind: output, shape index: {}]
  %s8 = sld [smem:[#allocation0]]
  $region50: #{tpu_custom_call.1} parent=0
    _
  %s10 = ssub.s32 1, %s8
  %s11 = scalar_select 0, %s10, %s8
  %12 = sst [smem:[#allocation2]] %s6
  $region1: #{tpu_custom_call.1} parent=0
    #allocation3 [shape = 'u8[8192]{0}', space=vmem, size = 0x2000, scoped, tag = 'input window, operand 0, single buffered']
    #allocation4 [shape = 's32[1]{0}', space=sflag, size = 0x4, scoped, tag = 'scoped memory for tpu_custom_call.1']
    #allocation5 [shape = 's32[1]{0}', space=sflag, size = 0x4, scoped, tag = 'scoped memory for tpu_custom_call.1']
    #allocation6 [shape = 'u8[16384]{0}', space=vmem, size = 0x4000, scoped, tag = 'input window, operand 1, single buffered']
    #allocation7 [shape = 's32[1]{0}', space=sflag, size = 0x4, scoped, tag = 'scoped memory for tpu_custom_call.1']
    #allocation8 [shape = 'u8[16384]{0}', space=vmem, size = 0x4000, scoped, tag = 'input window, operand 3, single buffered']
    #allocation9 [shape = 'u8[8192]{0}', space=vmem, size = 0x2000, scoped, tag = 'output window, operand 0, single buffered']
    %13 = vsyncpa [#allocation4], 0
    %14 = vsyncpa [#allocation7], 0
    %15 = vsyncpa [#allocation5], 0
    // Predicated region
    $region2: #{tpu_custom_call.1} parent=1 // pred_check
      _
    $region3: #{tpu_custom_call.1} parent=1 // pred_check_branch
      %17 = sbr.rel (0) target = $region5
    $region4: #{tpu_custom_call.1} parent=1 // pred_region
      %s19 = ssub.s32 256, 256
      %20 = vsyncadd [#allocation4], %s19
      %s21 = sshll.u32 [#allocation3], 4
      %s22 = int_to_ptr.vmem [resolvable:$true] %s21
      %27 = dma.hbm_to_vmem [thread:$0]  %s0, 256, %s22, [#allocation4], 128, 128, 8
    $region5: #{tpu_custom_call.1} parent=1 // pred_fallthru
      _
    // Predicated region
    $region6: #{tpu_custom_call.1} parent=1 // pred_check
      _
    $region7: #{tpu_custom_call.1} parent=1 // pred_check_branch
      %29 = sbr.rel (0) target = $region9
    $region8: #{tpu_custom_call.1} parent=1 // pred_region
      %s31 = ssub.s32 512, 512
      %32 = vsyncadd [#allocation7], %s31
      %s33 = sshll.u32 [#allocation6], 4
      %s34 = int_to_ptr.vmem [resolvable:$true] %s33
      %39 = dma.hbm_to_vmem [thread:$0]  %s1, 512, %s34, [#allocation7], 128, 128, 8
    $region9: #{tpu_custom_call.1} parent=1 // pred_fallthru
      _
    // Predicated region
    $region10: #{tpu_custom_call.1} parent=1 // pred_check
      _
    $region11: #{tpu_custom_call.1} parent=1 // pred_check_branch
      %41 = sbr.rel (0) target = $region13
    $region12: #{tpu_custom_call.1} parent=1 // pred_region
      _
    $region13: #{tpu_custom_call.1} parent=1 // pred_fallthru
      _
    // Predicated region
    $region14: #{tpu_custom_call.1} parent=1 // pred_check
      _
    $region15: #{tpu_custom_call.1} parent=1 // pred_check_branch
      %43 = sbr.rel (0) target = $region17
    $region16: #{tpu_custom_call.1} parent=1 // pred_region
      %s45 = ssub.s32 512, 512
      %46 = vsyncadd [#allocation7], %s45
      %s47 = sshll.u32 [#allocation8], 4
      %s48 = int_to_ptr.vmem [resolvable:$true] %s47
      %53 = dma.hbm_to_vmem [thread:$0]  %s3, 512, %s48, [#allocation7], 128, 128, 8
    $region17: #{tpu_custom_call.1} parent=1 // pred_fallthru
      _
    // Predicated region
    $region18: #{tpu_custom_call.1} parent=1 // pred_check
      _
    $region19: #{tpu_custom_call.1} parent=1 // pred_check_branch
      %55 = sbr.rel (0) target = $region21
    $region20: #{tpu_custom_call.1} parent=1 // pred_region
      _
    $region21: #{tpu_custom_call.1} parent=1 // pred_fallthru
      _
    // Predicated region
    $region22: #{tpu_custom_call.1} parent=1 // pred_check
      _
    $region23: #{tpu_custom_call.1} parent=1 // pred_check_branch
      %57 = sbr.rel (0) target = $region25
    $region24: #{tpu_custom_call.1} parent=1 // pred_region
      _
    $region25: #{tpu_custom_call.1} parent=1 // pred_fallthru
      _
    // Predicated region
    $region26: #{tpu_custom_call.1} parent=1 // pred_check
      _
    $region27: #{tpu_custom_call.1} parent=1 // pred_check_branch
      %59 = sbr.rel (0) target = $region29
    $region28: #{tpu_custom_call.1} parent=1 // pred_region
      _
    $region29: #{tpu_custom_call.1} parent=1 // pred_fallthru
      _
    // Predicated region
    $region30: #{tpu_custom_call.1} parent=1 // pred_check
      _
    $region31: #{tpu_custom_call.1} parent=1 // pred_check_branch
      %61 = sbr.rel (0) target = $region33
    $region32: #{tpu_custom_call.1} parent=1 // pred_region
      %62 = dma.done [#allocation4], 256
    $region33: #{tpu_custom_call.1} parent=1 // pred_fallthru
      _
    // Predicated region
    $region34: #{tpu_custom_call.1} parent=1 // pred_check
      _
    $region35: #{tpu_custom_call.1} parent=1 // pred_check_branch
      %64 = sbr.rel (0) target = $region37
    $region36: #{tpu_custom_call.1} parent=1 // pred_region
      %65 = dma.done [#allocation7], 512
    $region37: #{tpu_custom_call.1} parent=1 // pred_fallthru
      _
    // Predicated region
    $region38: #{tpu_custom_call.1} parent=1 // pred_check
      _
    $region39: #{tpu_custom_call.1} parent=1 // pred_check_branch
      %67 = sbr.rel (0) target = $region41
    $region40: #{tpu_custom_call.1} parent=1 // pred_region
      %68 = dma.done [#allocation7], 512
    $region41: #{tpu_custom_call.1} parent=1 // pred_fallthru
      _
    %v69 = vld [vmem:[%s2] sm:$0x1]
    %v70 = vld [vmem:[#allocation3] sm:$0xff]
    %v71 = vld [vmem:[#allocation3 + $0x8] sm:$0xff]
    %v72 = vld [vmem:[#allocation6] sm:$0xff]
    %v73 = vld [vmem:[#allocation6 + $0x8] sm:$0xff]
    %v74 = vld [vmem:[#allocation6 + $0x10] sm:$0xff]
    %v75 = vld [vmem:[#allocation6 + $0x18] sm:$0xff]
    %v77 = vlaneseq
    %v78 = vshrl.u32 %v77, 7
    %v79 = vsub.s32 0, %v78
    %v80 = vrot.slane %v69, %v79
    %vm82 = vcmask 261120
    %v84 = vsel %vm82, %v70, 0
    %v87 = vsel %vm82, %v71, 0
    %89 = vmatprep.subr.mxu0 0.0
    %90 = vmatpush1.msra.mxu0 0.0
    %91 = vmatprep.subr.mxu0 0.0
    %92 = vmatpush1.msra.mxu0 0.0
    %93 = vmatprep.subr.mxu0 0.0
    %94 = vmatpush1.msra.mxu0 0.0
    %95 = vmatprep.subr.mxu0 0.0
    %96 = vmatpush1.msra.mxu0 0.0
    %97 = vmatprep.subr.mxu0 0.0
    %98 = vmatpush1.msra.mxu0 0.0
    %99 = vmatprep.subr.mxu0 0.0
    %100 = vmatpush1.msra.mxu0 0.0
    %101 = vmatprep.subr.mxu0 0.0
    %102 = vmatpush1.msra.mxu0 0.0
    %103 = vmatprep.subr.mxu0 0.0
    %104 = vmatpush1.msra.mxu0 0.0
    %105 = vmatprep.subr.mxu0 0.0
    %106 = vmatpush1.msra.mxu0 0.0
    %107 = vmatprep.subr.mxu0 0.0
    %108 = vmatpush1.msra.mxu0 0.0
    %109 = vmatprep.subr.mxu0 0.0
    %110 = vmatpush1.msra.mxu0 0.0
    %111 = vmatprep.subr.mxu0 0.0
    %112 = vmatpush1.msra.mxu0 0.0
    %113 = vmatprep.subr.mxu0 0.0
    %114 = vmatpush1.msra.mxu0 %v75
    %115 = vmatprep.subr.mxu0 0.0
    %116 = vmatpush1.msra.mxu0 %v74
    %117 = vmatprep.subr.mxu0 0.0
    %118 = vmatpush1.msra.mxu0 %v73
    %119 = vmatprep.subr.mxu0 0.0
    %120 = vmatpush1.msra.mxu0 %v72
    %121 = vmatprep.subr.mxu0 0.0
    %122 = vmatpush2.msra.mxu0 0.0
    %123 = vmatprep.subr.mxu0 0.0
    %124 = vmatpush2.msra.mxu0 0.0
    %125 = vmatprep.subr.mxu0 0.0
    %126 = vmatpush2.msra.mxu0 0.0
    %127 = vmatprep.subr.mxu0 0.0
    %128 = vmatpush2.msra.mxu0 0.0
    %129 = vmatprep.subr.mxu0 0.0
    %130 = vmatpush2.msra.mxu0 0.0
    %131 = vmatprep.subr.mxu0 0.0
    %132 = vmatpush2.msra.mxu0 0.0
    %133 = vmatprep.subr.mxu0 0.0
    %134 = vmatpush2.msra.mxu0 0.0
    %135 = vmatprep.subr.mxu0 0.0
    %136 = vmatpush2.msra.mxu0 0.0
    %137 = vmatprep.subr.mxu0 0.0
    %138 = vmatpush2.msra.mxu0 0.0
    %139 = vmatprep.subr.mxu0 0.0
    %140 = vmatpush2.msra.mxu0 0.0
    %141 = vmatprep.subr.mxu0 0.0
    %142 = vmatpush2.msra.mxu0 0.0
    %143 = vmatprep.subr.mxu0 0.0
    %144 = vmatpush2.msra.mxu0 0.0
    %145 = vmatprep.subr.mxu0 0.0
    %146 = vmatpush2.msra.mxu0 0.0
    %147 = vmatprep.subr.mxu0 0.0
    %148 = vmatpush2.msra.mxu0 0.0
    %149 = vmatprep.subr.mxu0 0.0
    %150 = vmatpush2.msra.mxu0 0.0
    %151 = vmatprep.subr.mxu0 0.0
    %152 = vmatpush2.msra.mxu0 0.0
    %153 = vmatprep.mubr.f32.mxu0 0.0
    %154 = vmatmul.mubr.f32.gmra.mxu0 %v84
    %v155 = vpop.f32.mrf.mxu0
    %v156 = vadd.f32 %v80, %v155
    %v157 = vpop.f32.mrf.mxu0
    %158 = vmatprep.mubr.f32.mxu0 0.0
    %159 = vmatmul.mubr.f32.gmra.mxu0 %v87
    %v160 = vpop.f32.mrf.mxu0
    %v161 = vadd.f32 %v80, %v160
    %v162 = vpop.f32.mrf.mxu0
    %163 = vdwg.mxu0
    %v164 = vtanh.pop %v156
    %v165 = vtanh.pop %v161
    %v166 = vld [vmem:[#allocation8] sm:$0xff]
    %v167 = vld [vmem:[#allocation8 + $0x8] sm:$0xff]
    %v168 = vld [vmem:[#allocation8 + $0x10] sm:$0xff]
    %v169 = vld [vmem:[#allocation8 + $0x18] sm:$0xff]
    %v171 = vsel %vm82, %v164, 0
    %v174 = vsel %vm82, %v165, 0
    %176 = vmatprep.subr.mxu0 0.0
    %177 = vmatpush1.msra.mxu0 0.0
    %178 = vmatprep.subr.mxu0 0.0
    %179 = vmatpush1.msra.mxu0 0.0
    %180 = vmatprep.subr.mxu0 0.0
    %181 = vmatpush1.msra.mxu0 0.0
    %182 = vmatprep.subr.mxu0 0.0
    %183 = vmatpush1.msra.mxu0 0.0
    %184 = vmatprep.subr.mxu0 0.0
    %185 = vmatpush1.msra.mxu0 0.0
    %186 = vmatprep.subr.mxu0 0.0
    %187 = vmatpush1.msra.mxu0 0.0
    %188 = vmatprep.subr.mxu0 0.0
    %189 = vmatpush1.msra.mxu0 0.0
    %190 = vmatprep.subr.mxu0 0.0
    %191 = vmatpush1.msra.mxu0 0.0
    %192 = vmatprep.subr.mxu0 0.0
    %193 = vmatpush1.msra.mxu0 0.0
    %194 = vmatprep.subr.mxu0 0.0
    %195 = vmatpush1.msra.mxu0 0.0
    %196 = vmatprep.subr.mxu0 0.0
    %197 = vmatpush1.msra.mxu0 0.0
    %198 = vmatprep.subr.mxu0 0.0
    %199 = vmatpush1.msra.mxu0 0.0
    %200 = vmatprep.subr.mxu0 0.0
    %201 = vmatpush1.msra.mxu0 %v169
    %202 = vmatprep.subr.mxu0 0.0
    %203 = vmatpush1.msra.mxu0 %v168
    %204 = vmatprep.subr.mxu0 0.0
    %205 = vmatpush1.msra.mxu0 %v167
    %206 = vmatprep.subr.mxu0 0.0
    %207 = vmatpush1.msra.mxu0 %v166
    %208 = vmatprep.subr.mxu0 0.0
    %209 = vmatpush2.msra.mxu0 0.0
    %210 = vmatprep.subr.mxu0 0.0
    %211 = vmatpush2.msra.mxu0 0.0
    %212 = vmatprep.subr.mxu0 0.0
    %213 = vmatpush2.msra.mxu0 0.0
    %214 = vmatprep.subr.mxu0 0.0
    %215 = vmatpush2.msra.mxu0 0.0
    %216 = vmatprep.subr.mxu0 0.0
    %217 = vmatpush2.msra.mxu0 0.0
    %218 = vmatprep.subr.mxu0 0.0
    %219 = vmatpush2.msra.mxu0 0.0
    %220 = vmatprep.subr.mxu0 0.0
    %221 = vmatpush2.msra.mxu0 0.0
    %222 = vmatprep.subr.mxu0 0.0
    %223 = vmatpush2.msra.mxu0 0.0
    %224 = vmatprep.subr.mxu0 0.0
    %225 = vmatpush2.msra.mxu0 0.0
    %226 = vmatprep.subr.mxu0 0.0
    %227 = vmatpush2.msra.mxu0 0.0
    %228 = vmatprep.subr.mxu0 0.0
    %229 = vmatpush2.msra.mxu0 0.0
    %230 = vmatprep.subr.mxu0 0.0
    %231 = vmatpush2.msra.mxu0 0.0
    %232 = vmatprep.subr.mxu0 0.0
    %233 = vmatpush2.msra.mxu0 0.0
    %234 = vmatprep.subr.mxu0 0.0
    %235 = vmatpush2.msra.mxu0 0.0
    %236 = vmatprep.subr.mxu0 0.0
    %237 = vmatpush2.msra.mxu0 0.0
    %238 = vmatprep.subr.mxu0 0.0
    %239 = vmatpush2.msra.mxu0 0.0
    %240 = vmatprep.mubr.f32.mxu0 0.0
    %241 = vmatmul.mubr.f32.gmra.mxu0 %v171
    %v242 = vpop.f32.mrf.mxu0
    %v243 = vadd.f32 0.0, %v242
    %v244 = vpop.f32.mrf.mxu0
    %245 = vmatprep.mubr.f32.mxu0 0.0
    %246 = vmatmul.mubr.f32.gmra.mxu0 %v174
    %v247 = vpop.f32.mrf.mxu0
    %v248 = vadd.f32 0.0, %v247
    %v249 = vpop.f32.mrf.mxu0
    %250 = vdwg.mxu0
    %253 = vrot.lane.b32.xlu0 %v243, 96
    %v254 = vpop.permute.xlu0 %253
    %255 = vrot.lane.b32.xlu0 %v248, 96
    %v256 = vpop.permute.xlu0 %255
    %v257 = vsel %vm82, %v243, 0
    %v259 = vsel %vm82, %v248, 0
    %v261 = vsel %vm82, %v254, 0
    %v263 = vsel %vm82, %v256, 0
    %265 = vmatprep.subr.mxu0 0.0
    %266 = vmatpush1.xpose.msra.mxu0 0.0
    %267 = vmatprep.subr.mxu0 0.0
    %268 = vmatpush1.xpose.msra.mxu0 0.0
    %269 = vmatprep.subr.mxu0 0.0
    %270 = vmatpush1.xpose.msra.mxu0 0.0
    %271 = vmatprep.subr.mxu0 0.0
    %272 = vmatpush1.xpose.msra.mxu0 0.0
    %273 = vmatprep.subr.mxu0 0.0
    %274 = vmatpush1.xpose.msra.mxu0 0.0
    %275 = vmatprep.subr.mxu0 0.0
    %276 = vmatpush1.xpose.msra.mxu0 0.0
    %277 = vmatprep.subr.mxu0 0.0
    %278 = vmatpush1.xpose.msra.mxu0 0.0
    %279 = vmatprep.subr.mxu0 0.0
    %280 = vmatpush1.xpose.msra.mxu0 0.0
    %281 = vmatprep.subr.mxu0 0.0
    %282 = vmatpush1.xpose.msra.mxu0 0.0
    %283 = vmatprep.subr.mxu0 0.0
    %284 = vmatpush1.xpose.msra.mxu0 0.0
    %285 = vmatprep.subr.mxu0 0.0
    %286 = vmatpush1.xpose.msra.mxu0 0.0
    %287 = vmatprep.subr.mxu0 0.0
    %288 = vmatpush1.xpose.msra.mxu0 0.0
    %289 = vmatprep.subr.mxu0 0.0
    %290 = vmatpush1.xpose.msra.mxu0 0.0
    %291 = vmatprep.subr.mxu0 0.0
    %292 = vmatpush1.xpose.msra.mxu0 0.0
    %293 = vmatprep.subr.mxu0 0.0
    %294 = vmatpush1.xpose.msra.mxu0 %v263
    %295 = vmatprep.subr.mxu0 0.0
    %296 = vmatpush1.xpose.msra.mxu0 %v261
    %297 = vmatprep.subr.mxu0 0.0
    %298 = vmatpush2.xpose.msra.mxu0 0.0
    %299 = vmatprep.subr.mxu0 0.0
    %300 = vmatpush2.xpose.msra.mxu0 0.0
    %301 = vmatprep.subr.mxu0 0.0
    %302 = vmatpush2.xpose.msra.mxu0 0.0
    %303 = vmatprep.subr.mxu0 0.0
    %304 = vmatpush2.xpose.msra.mxu0 0.0
    %305 = vmatprep.subr.mxu0 0.0
    %306 = vmatpush2.xpose.msra.mxu0 0.0
    %307 = vmatprep.subr.mxu0 0.0
    %308 = vmatpush2.xpose.msra.mxu0 0.0
    %309 = vmatprep.subr.mxu0 0.0
    %310 = vmatpush2.xpose.msra.mxu0 0.0
    %311 = vmatprep.subr.mxu0 0.0
    %312 = vmatpush2.xpose.msra.mxu0 0.0
    %313 = vmatprep.subr.mxu0 0.0
    %314 = vmatpush2.xpose.msra.mxu0 0.0
    %315 = vmatprep.subr.mxu0 0.0
    %316 = vmatpush2.xpose.msra.mxu0 0.0
    %317 = vmatprep.subr.mxu0 0.0
    %318 = vmatpush2.xpose.msra.mxu0 0.0
    %319 = vmatprep.subr.mxu0 0.0
    %320 = vmatpush2.xpose.msra.mxu0 0.0
    %321 = vmatprep.subr.mxu0 0.0
    %322 = vmatpush2.xpose.msra.mxu0 0.0
    %323 = vmatprep.subr.mxu0 0.0
    %324 = vmatpush2.xpose.msra.mxu0 0.0
    %325 = vmatprep.subr.mxu0 0.0
    %326 = vmatpush2.xpose.msra.mxu0 0.0
    %327 = vmatprep.subr.mxu0 0.0
    %328 = vmatpush2.xpose.msra.mxu0 0.0
    %329 = vmatprep.mubr.f32.mxu0 0.0
    %330 = vmatmul.mubr.f32.gmra.mxu0 %v257
    %v331 = vpop.f32.mrf.mxu0
    %v332 = vadd.f32 0.0, %v331
    %v333 = vpop.f32.mrf.mxu0
    %334 = vmatprep.mubr.f32.mxu0 0.0
    %335 = vmatmul.mubr.f32.gmra.mxu0 %v259
    %v336 = vpop.f32.mrf.mxu0
    %v337 = vadd.f32 0.0, %v336
    %v338 = vpop.f32.mrf.mxu0
    %339 = vdwg.mxu0
    %v340 = vmul.f32 %v332, 0.17677669
    %v341 = vmul.f32 %v337, 0.17677669
    %vm342 = vcmask 130048
    %v343 = vsel %vm342, %v340, -inf
    %344 = vmax.xlane.f32.xlu0 %v343
    %v345 = vpop.xlane.xlu0 %344
    %v346 = vsel %vm342, %v341, -inf
    %347 = vmax.xlane.f32.xlu0 %v346
    %v348 = vpop.xlane.xlu0 %347
    %v349 = vsub.f32 %v340, %v345
    %v350 = vsub.f32 %v341, %v348
    %v351 = vmul.f32 %v349, 1.442695
    %v352 = vpow.pop %v351
    %v353 = vmul.f32 %v350, 1.442695
    %v354 = vpow.pop %v353
    %v355 = vsel %vm342, %v352, 0.0
    %356 = vadd.xlane.f32.xlu0 %v355
    %v357 = vpop.xlane.xlu0 %356
    %v358 = vsel %vm342, %v354, 0.0
    %359 = vadd.xlane.f32.xlu0 %v358
    %v360 = vpop.xlane.xlu0 %359
    %v361 = vrcp.pop %v357
    %v362 = vrcp.pop %v360
    %v363 = vmul.f32 %v352, %v361
    %v364 = vmul.f32 %v354, %v362
    %365 = vrot.lane.b32.xlu0 %v243, 64
    %v366 = vpop.permute.xlu0 %365
    %367 = vrot.lane.b32.xlu0 %v248, 64
    %v368 = vpop.permute.xlu0 %367
    %v372 = vsel %vm342, %v363, 0
    %v375 = vsel %vm342, %v364, 0
    %377 = vmatprep.subr.mxu0 0.0
    %378 = vmatpush1.msra.mxu0 0.0
    %379 = vmatprep.subr.mxu0 0.0
    %380 = vmatpush1.msra.mxu0 0.0
    %381 = vmatprep.subr.mxu0 0.0
    %382 = vmatpush1.msra.mxu0 0.0
    %383 = vmatprep.subr.mxu0 0.0
    %384 = vmatpush1.msra.mxu0 0.0
    %385 = vmatprep.subr.mxu0 0.0
    %386 = vmatpush1.msra.mxu0 0.0
    %387 = vmatprep.subr.mxu0 0.0
    %388 = vmatpush1.msra.mxu0 0.0
    %389 = vmatprep.subr.mxu0 0.0
    %390 = vmatpush1.msra.mxu0 0.0
    %391 = vmatprep.subr.mxu0 0.0
    %392 = vmatpush1.msra.mxu0 0.0
    %393 = vmatprep.subr.mxu0 0.0
    %394 = vmatpush1.msra.mxu0 0.0
    %395 = vmatprep.subr.mxu0 0.0
    %396 = vmatpush1.msra.mxu0 0.0
    %397 = vmatprep.subr.mxu0 0.0
    %398 = vmatpush1.msra.mxu0 0.0
    %399 = vmatprep.subr.mxu0 0.0
    %400 = vmatpush1.msra.mxu0 0.0
    %401 = vmatprep.subr.mxu0 0.0
    %402 = vmatpush1.msra.mxu0 0.0
    %403 = vmatprep.subr.mxu0 0.0
    %404 = vmatpush1.msra.mxu0 0.0
    %405 = vmatprep.subr.mxu0 0.0
    %406 = vmatpush1.msra.mxu0 %v368
    %407 = vmatprep.subr.mxu0 0.0
    %408 = vmatpush1.msra.mxu0 %v366
    %409 = vmatprep.subr.mxu0 0.0
    %410 = vmatpush2.msra.mxu0 0.0
    %411 = vmatprep.subr.mxu0 0.0
    %412 = vmatpush2.msra.mxu0 0.0
    %413 = vmatprep.subr.mxu0 0.0
    %414 = vmatpush2.msra.mxu0 0.0
    %415 = vmatprep.subr.mxu0 0.0
    %416 = vmatpush2.msra.mxu0 0.0
    %417 = vmatprep.subr.mxu0 0.0
    %418 = vmatpush2.msra.mxu0 0.0
    %419 = vmatprep.subr.mxu0 0.0
    %420 = vmatpush2.msra.mxu0 0.0
    %421 = vmatprep.subr.mxu0 0.0
    %422 = vmatpush2.msra.mxu0 0.0
    %423 = vmatprep.subr.mxu0 0.0
    %424 = vmatpush2.msra.mxu0 0.0
    %425 = vmatprep.subr.mxu0 0.0
    %426 = vmatpush2.msra.mxu0 0.0
    %427 = vmatprep.subr.mxu0 0.0
    %428 = vmatpush2.msra.mxu0 0.0
    %429 = vmatprep.subr.mxu0 0.0
    %430 = vmatpush2.msra.mxu0 0.0
    %431 = vmatprep.subr.mxu0 0.0
    %432 = vmatpush2.msra.mxu0 0.0
    %433 = vmatprep.subr.mxu0 0.0
    %434 = vmatpush2.msra.mxu0 0.0
    %435 = vmatprep.subr.mxu0 0.0
    %436 = vmatpush2.msra.mxu0 0.0
    %437 = vmatprep.subr.mxu0 0.0
    %438 = vmatpush2.msra.mxu0 0.0
    %439 = vmatprep.subr.mxu0 0.0
    %440 = vmatpush2.msra.mxu0 0.0
    %441 = vmatprep.mubr.f32.mxu0 0.0
    %442 = vmatmul.mubr.f32.gmra.mxu0 %v372
    %v443 = vpop.f32.mrf.mxu0
    %v444 = vadd.f32 0.0, %v443
    %v445 = vpop.f32.mrf.mxu0
    %446 = vmatprep.mubr.f32.mxu0 0.0
    %447 = vmatmul.mubr.f32.gmra.mxu0 %v375
    %v448 = vpop.f32.mrf.mxu0
    %v449 = vadd.f32 0.0, %v448
    %v450 = vpop.f32.mrf.mxu0
    %451 = vdwg.mxu0
    %v452 = vtanh.pop %v444
    %v453 = vtanh.pop %v449
    %s454 = sld [smem:[#allocation2]]
    %v455 = vld [vmem:[%s4] sm:$0x1]
    %v457 = vlaneseq
    %v458 = vshrl.u32 %v457, 7
    %v459 = vsub.s32 0, %v458
    %v460 = vrot.slane %v455, %v459
    %v462 = vmul.f32 %v164, %v460
    %v463 = vmul.f32 %v165, %v460
    %v464 = vld [vmem:[%s5] sm:$0x1]
    %v466 = vlaneseq
    %v467 = vshrl.u32 %v466, 7
    %v468 = vsub.s32 0, %v467
    %v469 = vrot.slane %v464, %v468
    %v471 = vmul.f32 %v452, %v469
    %v472 = vmul.f32 %v453, %v469
    %v473 = vadd.f32 %v462, %v471
    %v474 = vadd.f32 %v463, %v472
    %v475 = vsel %vm82, %v473, 0.0
    %476 = vadd.xlane.f32.xlu0 %v475
    %v477 = vpop.xlane.xlu0 %476
    %v478 = vsel %vm82, %v474, 0.0
    %479 = vadd.xlane.f32.xlu0 %v478
    %v480 = vpop.xlane.xlu0 %479
    %v481 = vstv %s454
    %v482 = vadd.f32 %v477, %v481
    %v483 = vadd.f32 %v480, %v481
    %484 = vst [vmem:[#allocation9] sm:$0xff] %v482
    %485 = vst [vmem:[#allocation9 + $0x8] sm:$0xff] %v483
    // Predicated region
    $region42: #{tpu_custom_call.1} parent=1 // pred_check
      _
    $region43: #{tpu_custom_call.1} parent=1 // pred_check_branch
      %487 = sbr.rel (0) target = $region45
    $region44: #{tpu_custom_call.1} parent=1 // pred_region
      %s489 = ssub.s32 256, 256
      %490 = vsyncadd [#allocation5], %s489
      %s491 = sshll.u32 [#allocation9], 4
      %s492 = int_to_ptr.vmem [resolvable:$true] %s491
      %497 = dma.vmem_to_hbm [thread:$0]  %s492, 256, %s7, [#allocation5], 128, 128, 8
    $region45: #{tpu_custom_call.1} parent=1 // pred_fallthru
      _
    // Predicated region
    $region46: #{tpu_custom_call.1} parent=1 // pred_check
      _
    $region47: #{tpu_custom_call.1} parent=1 // pred_check_branch
      %499 = sbr.rel (0) target = $region49
    $region48: #{tpu_custom_call.1} parent=1 // pred_region
      %500 = dma.done [#allocation5], 256
    $region49: #{tpu_custom_call.1} parent=1 // pred_fallthru
      _
    %501 = vsyncpa [#allocation4], 1
    %502 = vsyncpa [#allocation7], 1
    %503 = vsyncpa [#allocation5], 1

</llo_original>
